<compile_context>
chip_gen: v6e
topology: v6e:2x2x1
jax: 0.10.0
libtpu: 0.0.40
codegen_flags: <defaults>
</compile_context>

<pallas_src>
import functools

import jax
import jax.numpy as jnp
from jax import lax
from jax.experimental import pallas as pl
from jax.experimental.pallas import tpu as pltpu


def _wce_kernel(logits_ref, target_ref, *rest, num_classes, power, hw,
                tile_pix, has_weight, apply_mask):
    """One (batch, pixel-tile) step: (8,128) partial sums of logpy * w^power.

    logits_ref: (1, C, R, 128)   target_ref: (1, R, 128)
    weight_ref: (1, R, 128) [only if has_weight]   out_ref: (1, 8, 128)
    """
    if has_weight:
        weight_ref, out_ref = rest
    else:
        (out_ref,) = rest

    # Running max over classes (classes live on an outer, untiled axis ->
    # this is pure elementwise VPU work on (R, 128) tiles).
    m = logits_ref[0, 0].astype(jnp.float32)                       # (R, 128)
    for ci in range(1, num_classes):
        m = jnp.maximum(m, logits_ref[0, ci].astype(jnp.float32))

    # Clamped targets, as in torch.clamp(target, 0, c - 1).
    tgt = jnp.clip(target_ref[0].astype(jnp.int32), 0, num_classes - 1)

    # sum(exp(x - m)) and the one-hot gather x[target] in a single class pass.
    s = jnp.zeros_like(m)
    x_tgt = jnp.zeros_like(m)
    for ci in range(num_classes):
        xc = logits_ref[0, ci].astype(jnp.float32)
        s = s + jnp.exp(xc - m)
        x_tgt = x_tgt + jnp.where(tgt == ci, xc, 0.0)

    # log_softmax(x)[target] without materializing the full log_p tensor.
    logpy = x_tgt - m - jnp.log(s)                                 # (R, 128)

    if has_weight:
        wv = weight_ref[0].astype(jnp.float32)
        if power == 1:
            wpow = wv
        elif power == 2:
            wpow = wv * wv
        elif isinstance(power, int) and power > 0:
            wpow = wv
            for _ in range(power - 1):
                wpow = wpow * wv
        else:
            wpow = jnp.exp(jnp.float32(power) * jnp.log(wv))
        contrib = logpy * wpow
    else:
        contrib = logpy

    if apply_mask:
        # Zero the pixels that only exist because of HW padding (weight=None
        # path; the weighted path pads weight with zeros instead).
        r = contrib.shape[0]
        row = lax.broadcasted_iota(jnp.int32, (r, 128), 0)
        lane = lax.broadcasted_iota(jnp.int32, (r, 128), 1)
        pix = pl.program_id(1) * tile_pix + row * 128 + lane
        contrib = jnp.where(pix < hw, contrib, 0.0)

    # Fold (R, 128) -> (8, 128): sublane-aligned slice adds, no relayout.
    r = contrib.shape[0]
    acc = contrib[0:8]
    for r0 in range(8, r, 8):
        acc = acc + contrib[r0:r0 + 8]
    out_ref[0] = acc


def _center_crop(target_like, h, w):
    """Replicates WeightedCrossEntropy2d.crop (plain-JAX glue, static shapes)."""
    nt, ht, wt = target_like.shape
    off_w, off_h = (wt - w) // 2, (ht - h) // 2
    if off_w > 0 and off_h > 0:
        return target_like[:, off_h:ht - off_h, off_w:wt - off_w]
    return target_like


def weighted_cross_entropy_2d(logits_nchw, target_nhw, weight_nhw=None, power=2,
                              vmem_budget_bytes=12 * 1024 * 1024):
    """Pallas implementation of WeightedCrossEntropy2d.forward."""
    n, c, h, w = logits_nchw.shape

    target_nhw = _center_crop(target_nhw, h, w)
    assert target_nhw.shape == (n, h, w), (
        "cropped target shape does not match logits spatial shape")
    has_weight = weight_nhw is not None
    if has_weight:
        weight_nhw = _center_crop(weight_nhw, h, w)
        assert weight_nhw.shape == (n, h, w), (
            "cropped weight shape does not match logits spatial shape")

    hw = h * w
    hw_pad = ((hw + 1023) // 1024) * 1024        # multiple of 1024 -> R % 8 == 0

    # Pick the largest pixel tile (multiple of 1024, <= 8192) that divides the
    # padded spatial extent and whose double-buffered blocks fit the VMEM
    # budget (conservative so it works with default scoped limits on v5e-v7x).
    logit_bytes = jnp.dtype(logits_nchw.dtype).itemsize
    per_pixel_bytes = c * logit_bytes + 4 + (
        jnp.dtype(weight_nhw.dtype).itemsize if has_weight else 0)
    tile = 0
    t = min(8192, hw_pad)
    while t >= 1024:
        if hw_pad % t == 0 and 2 * t * per_pixel_bytes <= vmem_budget_bytes:
            tile = t
            break
        t -= 1024
    if tile == 0:
        tile = 1024
        # TODO(synk): for very large class counts, tile the class axis (or
        # raise vmem_limit_bytes) instead of relying on a 1024-pixel tile.

    num_blocks = hw_pad // tile
    r = tile // 128

    # Free reshapes of NCHW (no transpose); pad only if HW % 1024 != 0.
    logits_3d = logits_nchw.reshape(n, c, hw)
    target_2d = target_nhw.reshape(n, hw).astype(jnp.int32)
    if hw_pad != hw:
        pad = hw_pad - hw
        logits_3d = jnp.pad(logits_3d, ((0, 0), (0, 0), (0, pad)))
        target_2d = jnp.pad(target_2d, ((0, 0), (0, pad)))
    logits_4d = logits_3d.reshape(n, c, hw_pad // 128, 128)
    target_3d = target_2d.reshape(n, hw_pad // 128, 128)

    operands = [logits_4d, target_3d]
    in_specs = [
        pl.BlockSpec((1, c, r, 128), lambda b, p: (b, 0, p, 0)),
        pl.BlockSpec((1, r, 128), lambda b, p: (b, p, 0)),
    ]
    if has_weight:
        weight_2d = weight_nhw.reshape(n, hw)      # native dtype; cast in kernel
        if hw_pad != hw:
            weight_2d = jnp.pad(weight_2d, ((0, 0), (0, hw_pad - hw)))
        weight_3d = weight_2d.reshape(n, hw_pad // 128, 128)
        operands.append(weight_3d)
        in_specs.append(pl.BlockSpec((1, r, 128), lambda b, p: (b, p, 0)))

    apply_mask = (hw_pad != hw) and not has_weight

    kernel = functools.partial(
        _wce_kernel, num_classes=c, power=power, hw=hw, tile_pix=tile,
        has_weight=has_weight, apply_mask=apply_mask)

    partials = pl.pallas_call(
        kernel,
        out_shape=jax.ShapeDtypeStruct((n, num_blocks * 8, 128), jnp.float32),
        grid_spec=pltpu.PrefetchScalarGridSpec(
            num_scalar_prefetch=0,
            grid=(n, num_blocks),
            in_specs=in_specs,
            out_specs=pl.BlockSpec((1, 8, 128), lambda b, p: (b, p, 0)),
        ),
        compiler_params=pltpu.CompilerParams(
            dimension_semantics=("parallel", "parallel")),
    )(*operands)

    # loss = -(sum over pixels of log_p[target] * w^power) / (N*H*W)
    total = jnp.sum(partials, dtype=jnp.float32)
    return -total / jnp.float32(n * h * w)


def _reference(logits_nchw, target_nhw, weight_nhw=None, power=2):
    n, c, h, w = logits_nchw.shape
    log_p = jax.nn.log_softmax(logits_nchw.astype(jnp.float32), axis=1)
    tgt = jnp.clip(target_nhw, 0, c - 1)
    ymask = jax.nn.one_hot(tgt, c, axis=1, dtype=jnp.float32)
    if weight_nhw is not None:
        ymask = ymask * (weight_nhw.astype(jnp.float32) ** power)[:, None, :, :]
    logpy = jnp.sum(log_p * ymask, axis=1)
    return -jnp.mean(logpy)


if __name__ == "__main__":
    key = jax.random.PRNGKey(0)
    k1, k2, k3 = jax.random.split(key, 3)

    N, C, H, W = 2, 4, 16, 16
    logits = jax.random.normal(k1, (N, C, H, W), dtype=jnp.float32)
    target = jax.random.randint(k2, (N, H, W), minval=0, maxval=C, dtype=jnp.int32)
    weight = jax.random.uniform(k3, (N, H, W), dtype=jnp.float32)

    loss = weighted_cross_entropy_2d(logits, target, weight, power=2)
    loss = jax.block_until_ready(loss)
    ref = _reference(logits, target, weight, power=2)
    assert jnp.allclose(loss, ref, rtol=1e-5, atol=1e-5), (loss, ref)

    # weight=None specialization (no ones array streamed, padded pixels masked)
    loss_nw = jax.block_until_ready(weighted_cross_entropy_2d(logits, target, None))
    ref_nw = _reference(logits, target, None)
    assert jnp.allclose(loss_nw, ref_nw, rtol=1e-5, atol=1e-5), (loss_nw, ref_nw)

    print("KERNEL_OK")
</pallas_src>

<mosaic_0001>
module attributes {stable_mosaic.version = 11 : i64} {
  func.func @_wce_kernel(%arg0: i32, %arg1: i32, %arg2: memref<1x4x8x128xf32, #tpu.memory_space<vmem>>, %arg3: memref<1x8x128xi32, #tpu.memory_space<vmem>>, %arg4: memref<1x8x128xf32, #tpu.memory_space<vmem>>, %arg5: memref<1x8x128xf32, #tpu.memory_space<vmem>>) attributes {dimension_semantics = [#tpu.dimension_semantics<parallel>, #tpu.dimension_semantics<parallel>], iteration_bounds = array<i64: 2, 1>, scalar_prefetch = 0 : i64, scratch_operands = 0 : i64, tpu.core_type = #tpu.core_type<tc>, window_params = [{transform_indices = @transform_0, window_bounds = array<i64: 1, 4, 8, 128>}, {transform_indices = @transform_1, window_bounds = array<i64: 1, 8, 128>}, {transform_indices = @transform_2, window_bounds = array<i64: 1, 8, 128>}, {transform_indices = @transform_3, window_bounds = array<i64: 1, 8, 128>}]} {
    %c0 = arith.constant 0 : index
    %c0_0 = arith.constant 0 : index
    %c0_1 = arith.constant 0 : index
    %c0_2 = arith.constant 0 : index
    %0 = vector.load %arg2[%c0, %c0_0, %c0_1, %c0_2] : memref<1x4x8x128xf32, #tpu.memory_space<vmem>>, vector<1x1x8x128xf32>
    %1 = vector.shape_cast %0 : vector<1x1x8x128xf32> to vector<8x128xf32>
    %c0_3 = arith.constant 0 : index
    %c1 = arith.constant 1 : index
    %c0_4 = arith.constant 0 : index
    %c0_5 = arith.constant 0 : index
    %2 = vector.load %arg2[%c0_3, %c1, %c0_4, %c0_5] : memref<1x4x8x128xf32, #tpu.memory_space<vmem>>, vector<1x1x8x128xf32>
    %3 = vector.shape_cast %2 : vector<1x1x8x128xf32> to vector<8x128xf32>
    %4 = arith.maximumf %1, %3 : vector<8x128xf32>
    %c0_6 = arith.constant 0 : index
    %c2 = arith.constant 2 : index
    %c0_7 = arith.constant 0 : index
    %c0_8 = arith.constant 0 : index
    %5 = vector.load %arg2[%c0_6, %c2, %c0_7, %c0_8] : memref<1x4x8x128xf32, #tpu.memory_space<vmem>>, vector<1x1x8x128xf32>
    %6 = vector.shape_cast %5 : vector<1x1x8x128xf32> to vector<8x128xf32>
    %7 = arith.maximumf %4, %6 : vector<8x128xf32>
    %c0_9 = arith.constant 0 : index
    %c3 = arith.constant 3 : index
    %c0_10 = arith.constant 0 : index
    %c0_11 = arith.constant 0 : index
    %8 = vector.load %arg2[%c0_9, %c3, %c0_10, %c0_11] : memref<1x4x8x128xf32, #tpu.memory_space<vmem>>, vector<1x1x8x128xf32>
    %9 = vector.shape_cast %8 : vector<1x1x8x128xf32> to vector<8x128xf32>
    %10 = arith.maximumf %7, %9 : vector<8x128xf32>
    %c0_12 = arith.constant 0 : index
    %c0_13 = arith.constant 0 : index
    %c0_14 = arith.constant 0 : index
    %11 = vector.load %arg3[%c0_12, %c0_13, %c0_14] : memref<1x8x128xi32, #tpu.memory_space<vmem>>, vector<1x8x128xi32>
    %12 = vector.shape_cast %11 : vector<1x8x128xi32> to vector<8x128xi32>
    %c0_i32 = arith.constant 0 : i32
    %c3_i32 = arith.constant 3 : i32
    %13 = vector.broadcast %c0_i32 : i32 to vector<8x128xi32>
    %14 = arith.maxsi %13, %12 : vector<8x128xi32>
    %15 = vector.broadcast %c3_i32 : i32 to vector<8x128xi32>
    %16 = arith.minsi %15, %14 : vector<8x128xi32>
    %cst = arith.constant 0.000000e+00 : f32
    %17 = vector.broadcast %cst : f32 to vector<8x128xf32>
    %cst_15 = arith.constant 0.000000e+00 : f32
    %18 = vector.broadcast %cst_15 : f32 to vector<8x128xf32>
    %c0_16 = arith.constant 0 : index
    %c0_17 = arith.constant 0 : index
    %c0_18 = arith.constant 0 : index
    %c0_19 = arith.constant 0 : index
    %19 = vector.load %arg2[%c0_16, %c0_17, %c0_18, %c0_19] : memref<1x4x8x128xf32, #tpu.memory_space<vmem>>, vector<1x1x8x128xf32>
    %20 = vector.shape_cast %19 : vector<1x1x8x128xf32> to vector<8x128xf32>
    %21 = arith.subf %20, %10 : vector<8x128xf32>
    %22 = math.exp %21 : vector<8x128xf32>
    %23 = arith.addf %17, %22 : vector<8x128xf32>
    %c0_i32_20 = arith.constant 0 : i32
    %24 = vector.broadcast %c0_i32_20 : i32 to vector<8x128xi32>
    %25 = arith.cmpi eq, %16, %24 : vector<8x128xi32>
    %cst_21 = arith.constant 0.000000e+00 : f32
    %26 = vector.broadcast %cst_21 : f32 to vector<8x128xf32>
    %27 = arith.select %25, %20, %26 : vector<8x128xi1>, vector<8x128xf32>
    %28 = arith.addf %18, %27 : vector<8x128xf32>
    %c0_22 = arith.constant 0 : index
    %c1_23 = arith.constant 1 : index
    %c0_24 = arith.constant 0 : index
    %c0_25 = arith.constant 0 : index
    %29 = vector.load %arg2[%c0_22, %c1_23, %c0_24, %c0_25] : memref<1x4x8x128xf32, #tpu.memory_space<vmem>>, vector<1x1x8x128xf32>
    %30 = vector.shape_cast %29 : vector<1x1x8x128xf32> to vector<8x128xf32>
    %31 = arith.subf %30, %10 : vector<8x128xf32>
    %32 = math.exp %31 : vector<8x128xf32>
    %33 = arith.addf %23, %32 : vector<8x128xf32>
    %c1_i32 = arith.constant 1 : i32
    %34 = vector.broadcast %c1_i32 : i32 to vector<8x128xi32>
    %35 = arith.cmpi eq, %16, %34 : vector<8x128xi32>
    %cst_26 = arith.constant 0.000000e+00 : f32
    %36 = vector.broadcast %cst_26 : f32 to vector<8x128xf32>
    %37 = arith.select %35, %30, %36 : vector<8x128xi1>, vector<8x128xf32>
    %38 = arith.addf %28, %37 : vector<8x128xf32>
    %c0_27 = arith.constant 0 : index
    %c2_28 = arith.constant 2 : index
    %c0_29 = arith.constant 0 : index
    %c0_30 = arith.constant 0 : index
    %39 = vector.load %arg2[%c0_27, %c2_28, %c0_29, %c0_30] : memref<1x4x8x128xf32, #tpu.memory_space<vmem>>, vector<1x1x8x128xf32>
    %40 = vector.shape_cast %39 : vector<1x1x8x128xf32> to vector<8x128xf32>
    %41 = arith.subf %40, %10 : vector<8x128xf32>
    %42 = math.exp %41 : vector<8x128xf32>
    %43 = arith.addf %33, %42 : vector<8x128xf32>
    %c2_i32 = arith.constant 2 : i32
    %44 = vector.broadcast %c2_i32 : i32 to vector<8x128xi32>
    %45 = arith.cmpi eq, %16, %44 : vector<8x128xi32>
    %cst_31 = arith.constant 0.000000e+00 : f32
    %46 = vector.broadcast %cst_31 : f32 to vector<8x128xf32>
    %47 = arith.select %45, %40, %46 : vector<8x128xi1>, vector<8x128xf32>
    %48 = arith.addf %38, %47 : vector<8x128xf32>
    %c0_32 = arith.constant 0 : index
    %c3_33 = arith.constant 3 : index
    %c0_34 = arith.constant 0 : index
    %c0_35 = arith.constant 0 : index
    %49 = vector.load %arg2[%c0_32, %c3_33, %c0_34, %c0_35] : memref<1x4x8x128xf32, #tpu.memory_space<vmem>>, vector<1x1x8x128xf32>
    %50 = vector.shape_cast %49 : vector<1x1x8x128xf32> to vector<8x128xf32>
    %51 = arith.subf %50, %10 : vector<8x128xf32>
    %52 = math.exp %51 : vector<8x128xf32>
    %53 = arith.addf %43, %52 : vector<8x128xf32>
    %c3_i32_36 = arith.constant 3 : i32
    %54 = vector.broadcast %c3_i32_36 : i32 to vector<8x128xi32>
    %55 = arith.cmpi eq, %16, %54 : vector<8x128xi32>
    %cst_37 = arith.constant 0.000000e+00 : f32
    %56 = vector.broadcast %cst_37 : f32 to vector<8x128xf32>
    %57 = arith.select %55, %50, %56 : vector<8x128xi1>, vector<8x128xf32>
    %58 = arith.addf %48, %57 : vector<8x128xf32>
    %59 = arith.subf %58, %10 : vector<8x128xf32>
    %60 = math.log %53 : vector<8x128xf32>
    %61 = arith.subf %59, %60 : vector<8x128xf32>
    %c0_38 = arith.constant 0 : index
    %c0_39 = arith.constant 0 : index
    %c0_40 = arith.constant 0 : index
    %62 = vector.load %arg4[%c0_38, %c0_39, %c0_40] : memref<1x8x128xf32, #tpu.memory_space<vmem>>, vector<1x8x128xf32>
    %63 = vector.shape_cast %62 : vector<1x8x128xf32> to vector<8x128xf32>
    %64 = arith.mulf %63, %63 : vector<8x128xf32>
    %65 = arith.mulf %61, %64 : vector<8x128xf32>
    %c0_41 = arith.constant 0 : index
    %c0_42 = arith.constant 0 : index
    %c0_43 = arith.constant 0 : index
    %66 = vector.load %arg5[%c0_41, %c0_42, %c0_43] : memref<1x8x128xf32, #tpu.memory_space<vmem>>, vector<1x8x128xf32>
    %67 = vector.shape_cast %66 : vector<1x8x128xf32> to vector<8x128xf32>
    %68 = vector.shape_cast %65 : vector<8x128xf32> to vector<1x8x128xf32>
    tpu.vector_store %arg5[%c0_41, %c0_42, %c0_43], %68 {strides = array<i32>} : memref<1x8x128xf32, #tpu.memory_space<vmem>>, vector<1x8x128xf32>,
    return
  }
  func.func @transform_0(%arg0: i32, %arg1: i32) -> (i32, i32, i32, i32) {
    %c0_i32 = arith.constant 0 : i32
    %c0_i32_0 = arith.constant 0 : i32
    %c0_i32_1 = arith.constant 0 : i32
    return %arg0, %c0_i32, %arg1, %c0_i32_0 : i32, i32, i32, i32
  }
  func.func @transform_1(%arg0: i32, %arg1: i32) -> (i32, i32, i32) {
    %c0_i32 = arith.constant 0 : i32
    %c0_i32_0 = arith.constant 0 : i32
    return %arg0, %arg1, %c0_i32 : i32, i32, i32
  }
  func.func @transform_2(%arg0: i32, %arg1: i32) -> (i32, i32, i32) {
    %c0_i32 = arith.constant 0 : i32
    %c0_i32_0 = arith.constant 0 : i32
    return %arg0, %arg1, %c0_i32 : i32, i32, i32
  }
  func.func @transform_3(%arg0: i32, %arg1: i32) -> (i32, i32, i32) {
    %c0_i32 = arith.constant 0 : i32
    %c0_i32_0 = arith.constant 0 : i32
    return %arg0, %arg1, %c0_i32 : i32, i32, i32
  }
}

</mosaic_0001>

<llo_original>
// kernel: tpu_custom_call.1
$region0: #{tpu_custom_call.1}
  #allocation0 [shape = 'u32[]', space=smem, size = 0x4, offset = 0x4, fixed_abs, tag = 'smem constant byte address 0x4 - core index']
  #allocation1 [shape = 'u32[144,128]{1,0:T(1,128)}', space=vmem, size = 0x12000, scoped, tag = 'internal scratch']
  %s0 = inlined_call_operand.hbm [shape: f32[2,4,8,128], index: 0, kind: input, shape index: {}]
  %s1 = inlined_call_operand.hbm [shape: s32[2,8,128], index: 1, kind: input, shape index: {}]
  %s2 = inlined_call_operand.hbm [shape: f32[2,8,128], index: 2, kind: input, shape index: {}]
  %s3 = inlined_call_operand.hbm [shape: f32[2,8,128], index: 3, kind: output, shape index: {}]
  %s4 = sld [smem:[#allocation0]]
  $region57: #{tpu_custom_call.1} parent=0
    _
  %s6 = ssub.s32 1, %s4
  %s7 = scalar_select 0, %s6, %s4
  $region1: #{tpu_custom_call.1} parent=0
    #allocation2 [shape = 'u8[32768]{0}', space=vmem, size = 0x8000, scoped, tag = 'input window, operand 0']
    #allocation3 [shape = 's32[2]{0}', space=sflag, size = 0x8, scoped, tag = 'scoped memory for tpu_custom_call.1']
    #allocation4 [shape = 's32[2]{0}', space=sflag, size = 0x8, scoped, tag = 'scoped memory for tpu_custom_call.1']
    #allocation5 [shape = 'u8[8192]{0}', space=vmem, size = 0x2000, scoped, tag = 'input window, operand 1']
    #allocation6 [shape = 's32[2]{0}', space=sflag, size = 0x8, scoped, tag = 'scoped memory for tpu_custom_call.1']
    #allocation7 [shape = 'u8[8192]{0}', space=vmem, size = 0x2000, scoped, tag = 'input window, operand 2']
    #allocation8 [shape = 'u8[8192]{0}', space=vmem, size = 0x2000, scoped, tag = 'output window, operand 0']
    %8 = vsyncpa [#allocation3], 0
    %s9 = scalar_lea.sflag [#allocation3], 1
    %10 = vsyncpa %s9, 0
    %11 = vsyncpa [#allocation6], 0
    %s12 = scalar_lea.sflag [#allocation6], 1
    %13 = vsyncpa %s12, 0
    %14 = vsyncpa [#allocation4], 0
    %s15 = scalar_lea.sflag [#allocation4], 1
    %16 = vsyncpa %s15, 0
    loop: start=0, step=1, limit=4
    $region2: #{tpu_custom_call.1} parent=1 // loop_pre_header
      _
    $region3: #{tpu_custom_call.1} parent=1 // loop_header
      %s18 = sphi 0, %s22
      %p19 = scmp.ge.s32.totalorder %s18, 4
      %s25 = sphi 0, %s37
      %s26 = sphi 0, %s33
      %s27 = sphi 0, %s25
      %s28 = sphi 0, %s26
      %s29 = sphi 0, %s27
      %s30 = sphi 0, %s28
      %s42 = sphi 0, %s44
      %s45 = sphi 0, %s42
      %s46 = sphi 0, %s45
      %s62 = sphi 0, %s46
      %s70 = sphi 0, %s72
      %s73 = sphi 0, %s70
      %s74 = sphi 0, %s73
      %s90 = sphi 0, %s74
      %s98 = sphi 0, %s100
      %s101 = sphi 0, %s98
      %s102 = sphi 0, %s101
      %s118 = sphi 0, %s102
      %s126 = sphi 0, %s128
      %s129 = sphi 0, %s126
      %s130 = sphi 0, %s129
      %s146 = sphi 0, %s130
    $region4: #{tpu_custom_call.1} parent=1 // loop_header_branch
      %21 = sbr.rel (%p19) target = $region8
    $region5: #{tpu_custom_call.1} parent=1 // loop_body
      %s23 = ssub.s32 %s18, 1
      %s24 = ssub.s32 %s18, 2
      %s31 = sadd.s32 1, %s26
      %p32 = scmp.ge.s32.totalorder %s31, 1
      %s33 = scalar_select %p32, 0, %s31
      %s34 = sadd.s32 1, %s25
      %s35 = scalar_select %p32, %s34, %s25
      %p36 = scmp.ge.s32.totalorder %s35, 2
      %s37 = scalar_select %p36, 0, %s35
      %s38 = ssub.s32 %s25, %s37
      %s39 = ssub.s32 %s26, %s33
      %s40 = sor.u32 %s38, %s39
      %p41 = scmp.eq.s32.totalorder %s40, 0
      %s43 = sadd.s32 %s42, 1
      %s44 = scalar_select %p41, %s42, %s43
      %p47 = pneg %p41
      %p48 = scmp.eq.s32.totalorder %s18, 1
      %p49 = por %p47, %p48
      %p50 = scmp.ne.s32.totalorder %s42, %s45
      %p51 = scmp.eq.s32.totalorder %s18, 0
      %p52 = por %p50, %p51
      %p53 = scmp.ne.s32.totalorder %s42, %s45
      %p54 = scmp.eq.s32.totalorder %s23, 1
      %p55 = por %p53, %p54
      %p56 = scmp.ne.s32.totalorder %s45, %s46
      %p57 = scmp.eq.s32.totalorder %s23, 0
      %p58 = por %p56, %p57
      %p59 = scmp.ne.s32.totalorder %s45, %s46
      %p60 = scmp.eq.s32.totalorder %s24, 1
      %p61 = por %p59, %p60
      %p63 = scmp.ne.s32.totalorder %s46, %s62
      %p64 = scmp.eq.s32.totalorder %s24, 0
      %p65 = por %p63, %p64
      %s66 = ssub.s32 %s25, %s37
      %s67 = ssub.s32 %s26, %s33
      %s68 = sor.u32 %s66, %s67
      %p69 = scmp.eq.s32.totalorder %s68, 0
      %s71 = sadd.s32 %s70, 1
      %s72 = scalar_select %p69, %s70, %s71
      %p75 = pneg %p69
      %p76 = scmp.eq.s32.totalorder %s18, 1
      %p77 = por %p75, %p76
      %p78 = scmp.ne.s32.totalorder %s70, %s73
      %p79 = scmp.eq.s32.totalorder %s18, 0
      %p80 = por %p78, %p79
      %p81 = scmp.ne.s32.totalorder %s70, %s73
      %p82 = scmp.eq.s32.totalorder %s23, 1
      %p83 = por %p81, %p82
      %p84 = scmp.ne.s32.totalorder %s73, %s74
      %p85 = scmp.eq.s32.totalorder %s23, 0
      %p86 = por %p84, %p85
      %p87 = scmp.ne.s32.totalorder %s73, %s74
      %p88 = scmp.eq.s32.totalorder %s24, 1
      %p89 = por %p87, %p88
      %p91 = scmp.ne.s32.totalorder %s74, %s90
      %p92 = scmp.eq.s32.totalorder %s24, 0
      %p93 = por %p91, %p92
      %s94 = ssub.s32 %s25, %s37
      %s95 = ssub.s32 %s26, %s33
      %s96 = sor.u32 %s94, %s95
      %p97 = scmp.eq.s32.totalorder %s96, 0
      %s99 = sadd.s32 %s98, 1
      %s100 = scalar_select %p97, %s98, %s99
      %p103 = pneg %p97
      %p104 = scmp.eq.s32.totalorder %s18, 1
      %p105 = por %p103, %p104
      %p106 = scmp.ne.s32.totalorder %s98, %s101
      %p107 = scmp.eq.s32.totalorder %s18, 0
      %p108 = por %p106, %p107
      %p109 = scmp.ne.s32.totalorder %s98, %s101
      %p110 = scmp.eq.s32.totalorder %s23, 1
      %p111 = por %p109, %p110
      %p112 = scmp.ne.s32.totalorder %s101, %s102
      %p113 = scmp.eq.s32.totalorder %s23, 0
      %p114 = por %p112, %p113
      %p115 = scmp.ne.s32.totalorder %s101, %s102
      %p116 = scmp.eq.s32.totalorder %s24, 1
      %p117 = por %p115, %p116
      %p119 = scmp.ne.s32.totalorder %s102, %s118
      %p120 = scmp.eq.s32.totalorder %s24, 0
      %p121 = por %p119, %p120
      %s122 = ssub.s32 %s25, %s37
      %s123 = ssub.s32 %s26, %s33
      %s124 = sor.u32 %s122, %s123
      %p125 = scmp.eq.s32.totalorder %s124, 0
      %s127 = sadd.s32 %s126, 1
      %s128 = scalar_select %p125, %s126, %s127
      %p131 = pneg %p125
      %p132 = scmp.eq.s32.totalorder %s18, 1
      %p133 = por %p131, %p132
      %p134 = scmp.ne.s32.totalorder %s126, %s129
      %p135 = scmp.eq.s32.totalorder %s18, 0
      %p136 = por %p134, %p135
      %p137 = scmp.ne.s32.totalorder %s126, %s129
      %p138 = scmp.eq.s32.totalorder %s23, 1
      %p139 = por %p137, %p138
      %p140 = scmp.ne.s32.totalorder %s129, %s130
      %p141 = scmp.eq.s32.totalorder %s23, 0
      %p142 = por %p140, %p141
      %p143 = scmp.ne.s32.totalorder %s129, %s130
      %p144 = scmp.eq.s32.totalorder %s24, 1
      %p145 = por %p143, %p144
      %p147 = scmp.ne.s32.totalorder %s130, %s146
      %p148 = scmp.eq.s32.totalorder %s24, 0
      %p149 = por %p147, %p148
      %p150 = scmp.le.s32.totalorder 1, %s18
      %p151 = scmp.lt.s32.totalorder %s18, 3
      %p152 = pnand %p150, %p151
      %p153 = pneg %p152
      // Predicated region
      $region9: #{tpu_custom_call.1} parent=5 // pred_check
        _
      $region10: #{tpu_custom_call.1} parent=5 // pred_check_branch
        %155 = sbr.rel (%p152) target = $region12
      $region11: #{tpu_custom_call.1} parent=5 // pred_region
        %s156 = ssub.s32 %s18, 1
      $region12: #{tpu_custom_call.1} parent=5 // pred_fallthru
        _
      %p157 = scmp.lt.s32.totalorder %s18, 2
      // Predicated region
      $region13: #{tpu_custom_call.1} parent=5 // pred_check
        %p158 = pneg %p157
      $region14: #{tpu_custom_call.1} parent=5 // pred_check_branch
        %160 = sbr.rel (%p158) target = $region16
      $region15: #{tpu_custom_call.1} parent=5 // pred_region
        // Predicated region
        $region17: #{tpu_custom_call.1} parent=15 // pred_check
          %p161 = pneg %p52
        $region18: #{tpu_custom_call.1} parent=15 // pred_check_branch
          %163 = sbr.rel (%p161) target = $region20
        $region19: #{tpu_custom_call.1} parent=15 // pred_region
          %s164 = sand.u32 %s42, 1
          %s165 = scalar_lea.sflag [#allocation3], %s164
          %s166 = sand.u32 %s42, 1
          %s167 = smul.addr %s166, 32
          %s168 = scalar_lea.vmem [#allocation2], %s167
          %s170 = ssub.s32 512, 512
          %171 = vsyncadd %s165, %s170
          %s172 = smul.addr %s25, 4
          %s173 = sadd.s32 %s26, %s172
          %s174 = smul.addr %s173, 128
          %s175 = scalar_lea.hbm %s0, %s174
          %s176 = sshll.u32 %s168, 4
          %s177 = int_to_ptr.vmem [resolvable:$true] %s176
          %182 = dma.hbm_to_vmem [thread:$0]  %s175, 512, %s177, %s165, 128, 128, 8
        $region20: #{tpu_custom_call.1} parent=15 // pred_fallthru
          _
        // Predicated region
        $region21: #{tpu_custom_call.1} parent=15 // pred_check
          %p183 = pneg %p80
        $region22: #{tpu_custom_call.1} parent=15 // pred_check_branch
          %185 = sbr.rel (%p183) target = $region24
        $region23: #{tpu_custom_call.1} parent=15 // pred_region
          %s186 = sand.u32 %s18, 1
          %s187 = scalar_lea.sflag [#allocation6], %s186
          %s188 = sand.u32 %s70, 1
          %s189 = smul.addr %s188, 8
          %s190 = scalar_lea.vmem [#allocation5], %s189
          %s192 = ssub.s32 128, 128
          %193 = vsyncadd %s187, %s192
          %s194 = sadd.s32 %s26, %s25
          %s195 = smul.addr %s194, 128
          %s196 = scalar_lea.hbm %s1, %s195
          %s198 = sshll.u32 %s190, 4
          %s199 = int_to_ptr.vmem [resolvable:$true] %s198
          %201 = dma.hbm_to_vmem [thread:$0]  %s196, 128, %s199, %s187
        $region24: #{tpu_custom_call.1} parent=15 // pred_fallthru
          _
        // Predicated region
        $region25: #{tpu_custom_call.1} parent=15 // pred_check
          %p202 = pneg %p108
        $region26: #{tpu_custom_call.1} parent=15 // pred_check_branch
          %204 = sbr.rel (%p202) target = $region28
        $region27: #{tpu_custom_call.1} parent=15 // pred_region
          %s205 = sand.u32 %s18, 1
          %s206 = scalar_lea.sflag [#allocation6], %s205
          %s207 = sand.u32 %s98, 1
          %s208 = smul.addr %s207, 8
          %s209 = scalar_lea.vmem [#allocation7], %s208
          %s211 = ssub.s32 128, 128
          %212 = vsyncadd %s206, %s211
          %s213 = sadd.s32 %s26, %s25
          %s214 = smul.addr %s213, 128
          %s215 = scalar_lea.hbm %s2, %s214
          %s217 = sshll.u32 %s209, 4
          %s218 = int_to_ptr.vmem [resolvable:$true] %s217
          %220 = dma.hbm_to_vmem [thread:$0]  %s215, 128, %s218, %s206
        $region28: #{tpu_custom_call.1} parent=15 // pred_fallthru
          _
      $region16: #{tpu_custom_call.1} parent=5 // pred_fallthru
        _
      %p221 = scmp.le.s32.totalorder 1, %s18
      %p222 = scmp.lt.s32.totalorder %s18, 3
      %p223 = pnand %p221, %p222
      %p224 = pneg %p223
      // Predicated region
      $region29: #{tpu_custom_call.1} parent=5 // pred_check
        _
      $region30: #{tpu_custom_call.1} parent=5 // pred_check_branch
        %226 = sbr.rel (%p223) target = $region32
      $region31: #{tpu_custom_call.1} parent=5 // pred_region
        %s227 = ssub.s32 %s18, 1
        %s228 = sand.u32 %s45, 1
        %s229 = scalar_lea.sflag [#allocation3], %s228
        %s230 = sand.u32 %s45, 1
        %s231 = smul.addr %s230, 32
        %s232 = scalar_lea.vmem [#allocation2], %s231
        // Predicated region
        $region33: #{tpu_custom_call.1} parent=31 // pred_check
          %p233 = pneg %p58
        $region34: #{tpu_custom_call.1} parent=31 // pred_check_branch
          %235 = sbr.rel (%p233) target = $region36
        $region35: #{tpu_custom_call.1} parent=31 // pred_region
          %236 = dma.done %s229, 512
        $region36: #{tpu_custom_call.1} parent=31 // pred_fallthru
          _
        %s237 = sand.u32 %s23, 1
        %s238 = scalar_lea.sflag [#allocation6], %s237
        %s239 = sand.u32 %s73, 1
        %s240 = smul.addr %s239, 8
        %s241 = scalar_lea.vmem [#allocation5], %s240
        // Predicated region
        $region37: #{tpu_custom_call.1} parent=31 // pred_check
          %p242 = pneg %p86
        $region38: #{tpu_custom_call.1} parent=31 // pred_check_branch
          %244 = sbr.rel (%p242) target = $region40
        $region39: #{tpu_custom_call.1} parent=31 // pred_region
          %245 = dma.done %s238, 128
        $region40: #{tpu_custom_call.1} parent=31 // pred_fallthru
          _
        %s246 = sand.u32 %s23, 1
        %s247 = scalar_lea.sflag [#allocation6], %s246
        %s248 = sand.u32 %s101, 1
        %s249 = smul.addr %s248, 8
        %s250 = scalar_lea.vmem [#allocation7], %s249
        // Predicated region
        $region41: #{tpu_custom_call.1} parent=31 // pred_check
          %p251 = pneg %p114
        $region42: #{tpu_custom_call.1} parent=31 // pred_check_branch
          %253 = sbr.rel (%p251) target = $region44
        $region43: #{tpu_custom_call.1} parent=31 // pred_region
          %254 = dma.done %s247, 128
        $region44: #{tpu_custom_call.1} parent=31 // pred_fallthru
          _
        %s255 = sand.u32 %s45, 1
        %s256 = scalar_lea.sflag [#allocation3], %s255
        %s257 = sand.u32 %s45, 1
        %s258 = smul.addr %s257, 32
        %s259 = scalar_lea.vmem [#allocation2], %s258
        %p260 = pneg %p58
        %p261 = pneg %p55
        %s262 = sand.u32 %s23, 1
        %s263 = scalar_lea.sflag [#allocation6], %s262
        %s264 = sand.u32 %s73, 1
        %s265 = smul.addr %s264, 8
        %s266 = scalar_lea.vmem [#allocation5], %s265
        %p267 = pneg %p86
        %p268 = pneg %p83
        %s269 = sand.u32 %s23, 1
        %s270 = scalar_lea.sflag [#allocation6], %s269
        %s271 = sand.u32 %s101, 1
        %s272 = smul.addr %s271, 8
        %s273 = scalar_lea.vmem [#allocation7], %s272
        %p274 = pneg %p114
        %p275 = pneg %p111
        %p276 = pneg %p142
        %p277 = pneg %p139
        %s278 = sand.u32 %s129, 1
        %s279 = scalar_lea.sflag [#allocation4], %s278
        %s280 = sand.u32 %s129, 1
        %s281 = smul.addr %s280, 8
        %s282 = scalar_lea.vmem [#allocation8], %s281
        %v283 = vld [vmem:[%s232] sm:$0xff]
        %s284 = scalar_lea.vmem %s232, 8 [#allocation2]
        %v285 = vld [vmem:[%s284] sm:$0xff]
        %v286 = vmax.f32 %v283, %v285
        %s287 = scalar_lea.vmem %s232, 16 [#allocation2]
        %v288 = vld [vmem:[%s287] sm:$0xff]
        %v289 = vmax.f32 %v286, %v288
        %s290 = scalar_lea.vmem %s232, 24 [#allocation2]
        %v291 = vld [vmem:[%s290] sm:$0xff]
        %v292 = vmax.f32 %v289, %v291
        %v293 = vld [vmem:[%s241] sm:$0xff]
        %vm294 = vcmp.gt.s32.totalorder %v293, 0
        %v295 = vsel %vm294, %v293, 0
        %vm296 = vcmp.lt.s32.totalorder %v295, 3
        %v297 = vsel %vm296, %v295, 3
        %v298 = vsub.f32 %v283, %v292
        %v299 = vmul.f32 %v298, 1.442695
        %v300 = vpow.pop %v299
        %v301 = vadd.f32 %v300, 0.0
        %vm302 = vcmp.eq.s32.totalorder %v297, 0
        %v303 = vsel %vm302, %v283, 0.0
        %v304 = vadd.f32 %v303, 0.0
        %v305 = vsub.f32 %v285, %v292
        %v306 = vmul.f32 %v305, 1.442695
        %v307 = vpow.pop %v306
        %v308 = vadd.f32 %v301, %v307
        %vm309 = vcmp.eq.s32.totalorder %v297, 1
        %v310 = vsel %vm309, %v285, 0.0
        %v311 = vadd.f32 %v304, %v310
        %v312 = vsub.f32 %v288, %v292
        %v313 = vmul.f32 %v312, 1.442695
        %v314 = vpow.pop %v313
        %v315 = vadd.f32 %v308, %v314
        %vm316 = vcmp.eq.s32.totalorder %v297, 2
        %v317 = vsel %vm316, %v288, 0.0
        %v318 = vadd.f32 %v311, %v317
        %v319 = vsub.f32 %v291, %v292
        %v320 = vmul.f32 %v319, 1.442695
        %v321 = vpow.pop %v320
        %v322 = vadd.f32 %v315, %v321
        %vm323 = vcmp.eq.s32.totalorder %v297, 3
        %v324 = vsel %vm323, %v291, 0.0
        %v325 = vadd.f32 %v318, %v324
        %v326 = vsub.f32 %v325, %v292
        %v327 = vlog2.pop %v322
        %v328 = vmul.f32 %v327, 0.6931472
        %v329 = vsub.f32 %v326, %v328
        %v330 = vld [vmem:[%s250] sm:$0xff]
        %v331 = vmul.f32 %v330, %v330
        %v332 = vmul.f32 %v329, %v331
        %333 = vst [vmem:[%s282] sm:$0xff] %v332
        %s334 = sand.u32 %s129, 1
        %s335 = scalar_lea.sflag [#allocation4], %s334
        %s336 = sand.u32 %s129, 1
        %s337 = smul.addr %s336, 8
        %s338 = scalar_lea.vmem [#allocation8], %s337
        // Predicated region
        $region45: #{tpu_custom_call.1} parent=31 // pred_check
          %p339 = pneg %p139
        $region46: #{tpu_custom_call.1} parent=31 // pred_check_branch
          %341 = sbr.rel (%p339) target = $region48
        $region47: #{tpu_custom_call.1} parent=31 // pred_region
          %s343 = ssub.s32 128, 128
          %344 = vsyncadd %s335, %s343
          %s345 = sadd.s32 %s28, %s27
          %s346 = smul.addr %s345, 128
          %s347 = scalar_lea.hbm %s3, %s346
          %s349 = sshll.u32 %s338, 4
          %s350 = int_to_ptr.vmem [resolvable:$true] %s349
          %352 = dma.vmem_to_hbm [thread:$0]  %s350, 128, %s347, %s335
        $region48: #{tpu_custom_call.1} parent=31 // pred_fallthru
          _
      $region32: #{tpu_custom_call.1} parent=5 // pred_fallthru
        _
      %p353 = scmp.le.s32.totalorder 2, %s18
      // Predicated region
      $region49: #{tpu_custom_call.1} parent=5 // pred_check
        %p354 = pneg %p353
      $region50: #{tpu_custom_call.1} parent=5 // pred_check_branch
        %356 = sbr.rel (%p354) target = $region52
      $region51: #{tpu_custom_call.1} parent=5 // pred_region
        %s357 = ssub.s32 %s18, 2
        // Predicated region
        $region53: #{tpu_custom_call.1} parent=51 // pred_check
          %p358 = pneg %p145
        $region54: #{tpu_custom_call.1} parent=51 // pred_check_branch
          %360 = sbr.rel (%p358) target = $region56
        $region55: #{tpu_custom_call.1} parent=51 // pred_region
          %s361 = sand.u32 %s130, 1
          %s362 = scalar_lea.sflag [#allocation4], %s361
          %s363 = sand.u32 %s130, 1
          %s364 = smul.addr %s363, 8
          %s365 = scalar_lea.vmem [#allocation8], %s364
          %366 = dma.done %s362, 128
        $region56: #{tpu_custom_call.1} parent=51 // pred_fallthru
          _
      $region52: #{tpu_custom_call.1} parent=5 // pred_fallthru
        _
    $region6: #{tpu_custom_call.1} parent=1 // loop_footer
      %s22 = sadd.s32 1, %s18
    $region7: #{tpu_custom_call.1} parent=1 // loop_footer_branch
      %17 = sbr.rel target = $region3
    $region8: #{tpu_custom_call.1} parent=1 // loop_exit
      _
    %367 = vsyncpa [#allocation3], 1
    %s368 = scalar_lea.sflag [#allocation3], 1
    %369 = vsyncpa %s368, 1
    %370 = vsyncpa [#allocation6], 1
    %s371 = scalar_lea.sflag [#allocation6], 1
    %372 = vsyncpa %s371, 1
    %373 = vsyncpa [#allocation4], 1
    %s374 = scalar_lea.sflag [#allocation4], 1
    %375 = vsyncpa %s374, 1

</llo_original>
